<compile_context>
chip_gen: v5e
topology: v5e:2x2
jax: 0.10.0
libtpu: 0.0.40
codegen_flags: <defaults>
</compile_context>

<pallas_src>
import jax
import jax.numpy as jnp
from jax.experimental import pallas as pl
from jax.experimental.pallas import tpu as pltpu


def _identity_dma_kernel(x_hbm_ref, o_hbm_ref):
    """Whole-buffer HBM -> HBM copy via one async DMA (canonical Pallas TPU DMA pattern)."""
    def body(sem):
        copy = pltpu.make_async_copy(x_hbm_ref, o_hbm_ref, sem)
        copy.start()
        copy.wait()
    pl.run_scoped(body, pltpu.SemaphoreType.DMA)


@jax.jit
def identity_forward(x):
    """Identity.forward(x) = x, implemented as a single HBM->HBM DMA Pallas kernel."""
    return pl.pallas_call(
        _identity_dma_kernel,
        out_shape=jax.ShapeDtypeStruct(x.shape, x.dtype),
        in_specs=[pl.BlockSpec(memory_space=pl.ANY)],   # keep input in HBM, no auto-DMA
        out_specs=pl.BlockSpec(memory_space=pl.ANY),    # output written directly by the DMA
    )(x)


if __name__ == "__main__":
    key = jax.random.PRNGKey(0)

    # NCHW image batch, consistent with the module's callers.
    N, C, H, W = 2, 4, 16, 16
    x = jax.random.normal(key, (N, C, H, W), jnp.float32)

    out = jax.block_until_ready(identity_forward(x))
    assert out.shape == x.shape
    assert out.dtype == x.dtype
    assert bool(jnp.all(out == x))

    # Ragged, sub-32-bit input: no padding, slicing, or (8,128) alignment plumbing is
    # needed because the kernel copies the whole buffer with a single DMA.
    y = jax.random.normal(jax.random.PRNGKey(0), (3, 5, 7), jnp.bfloat16)
    out_y = jax.block_until_ready(identity_forward(y))
    assert out_y.shape == y.shape
    assert out_y.dtype == y.dtype
    assert bool(jnp.all(out_y == y))

    print("KERNEL_OK")
</pallas_src>

<mosaic_0001>
module attributes {stable_mosaic.version = 11 : i64} {
  func.func @_identity_dma_kernel(%arg0: memref<2x4x16x16xf32, #tpu.memory_space<any>>, %arg1: memref<2x4x16x16xf32, #tpu.memory_space<any>>) attributes {dimension_semantics = [], scalar_prefetch = 0 : i64, scratch_operands = 0 : i64, tpu.core_type = #tpu.core_type<tc>} {
    "tpu.region"() ({
      %0 = tpu.sem_alloc : memref<!tpu.dma_semaphore, #tpu.memory_space<semaphore_mem>>
      tpu.enqueue_dma source(%arg0 : memref<2x4x16x16xf32, #tpu.memory_space<any>>) target(%arg1 : memref<2x4x16x16xf32, #tpu.memory_space<any>>) target_semaphore(%0 : memref<!tpu.dma_semaphore, #tpu.memory_space<semaphore_mem>>)
      tpu.wait_dma2 semaphore(%0 : memref<!tpu.dma_semaphore, #tpu.memory_space<semaphore_mem>>) src(%arg0 : memref<2x4x16x16xf32, #tpu.memory_space<any>>) dst(%arg1 : memref<2x4x16x16xf32, #tpu.memory_space<any>>)
      tpu.yield
    }) : () -> ()
    return
  }
}

</mosaic_0001>

<llo_original>
// kernel: identity_forward.1
$region0: #{identity_forward.1}
  #allocation0 [shape = 'u32[]', space=smem, size = 0x4, offset = 0x4, fixed_abs, tag = 'smem constant byte address 0x4 - core index']
  #allocation1 [shape = 'u32[72,128]{1,0:T(1,128)}', space=vmem, size = 0x9000, scoped, tag = 'internal scratch']
  #allocation3 [shape = 's32[]', space=sflag, size = 0x4, offset = 0, fixed_abs, tag = 'sflag constant byte address 0x0 - dummy sync flag']
  #allocation4 [shape = 'u32[0]{0}', space=smem, size = 0, offset = 0, fixed_abs, tag = 'smem constant byte address 0x0 - null']
  %s0 = inlined_call_operand.hbm [shape: f32[2,4,16,16], index: 0, kind: input, shape index: {}]
  %s1 = inlined_call_operand.hbm [shape: f32[2,4,16,16], index: 1, kind: output, shape index: {}]
  %s2 = sld [smem:[#allocation0]]
  $region3: #{identity_forward.1} parent=0
    _
  %s4 = ssub.s32 1, %s2
  %s5 = scalar_select 0, %s4, %s2
  $region2: #{identity_forward.1} parent=0
    #allocation2 [shape = 's32[1]{0}', space=sflag, size = 0x4, scoped, tag = 'scoped memory for identity_forward.1']
    %s7 = sshll.u32 1, 14
    %s8 = sxor.u32 4294967295, %s7
    %s10 = sshll.u32 %s0, 4
    %s11 = int_to_ptr.hbm [resolvable:$true] %s10
    %s12 = sshll.u32 %s1, 4
    %s13 = int_to_ptr.hbm [resolvable:$true] %s12
    %16 = dma.general %s11, 2048, %s13, [#allocation2], [#allocation3], [#allocation4], 0, 0
    %s17 = smul.u32 2, 4
    %s18 = smul.u32 %s17, 16
    %s19 = smul.u32 %s18, 1
    %s20 = sshll.u32 %s19, 4
    %21 = dma.done [#allocation2], %s20

</llo_original>
